<compile_context>
chip_gen: v7x
topology: tpu7x:2x2x1
jax: 0.10.0
libtpu: 0.0.40
codegen_flags: <defaults>
</compile_context>

<pallas_src>
import functools

import jax
import jax.numpy as jnp
from jax.experimental import pallas as pl
from jax.experimental.pallas import tpu as pltpu


def _round_up(x, m):
    return (x + m - 1) // m * m


def _largest_tile(v_pad, cap):
    """Largest multiple of 128 that divides v_pad and is <= cap."""
    m = v_pad // 128
    best = 1
    for d in range(1, min(m, max(cap // 128, 1)) + 1):
        if m % d == 0:
            best = d
    return 128 * best


def _vmem_capacity_bytes():
    try:
        return int(pltpu.get_tpu_info().vmem_capacity_bytes)
    except Exception:
        return 64 * 1024 * 1024   # conservative fallback: v7x per-TC VMEM


# ---------------------------------------------------------------------------
# Kernels
# ---------------------------------------------------------------------------

def _fused_resident_kernel(x_ref, w1t_ref, b1_ref, w2t_ref, o_ref):
    """Weight-resident fast path: one grid step per batch tile."""
    h = jnp.dot(x_ref[...], w1t_ref[...], preferred_element_type=jnp.float32)
    h = h + b1_ref[...]
    o_ref[...] = jnp.dot(h.astype(w2t_ref.dtype), w2t_ref[...],
                         preferred_element_type=jnp.float32).astype(o_ref.dtype)


def _two_phase_kernel(x_ref, w1t_ref, b1_ref, w2t_ref, o_ref,
                      h_ref, hb_ref, *, num_k):
    t = pl.program_id(1)

    @pl.when(t == 0)
    def _init():
        # Fold the bias into the accumulator init (f32, once per batch tile).
        h_ref[...] = jnp.broadcast_to(b1_ref[...], h_ref.shape)

    @pl.when(t < num_k)
    def _accumulate():
        # Phase 1: h += x_tile @ W1t_tile   (bf16 x bf16 -> f32 on the MXU).
        h_ref[...] += jnp.dot(x_ref[...], w1t_ref[...],
                              preferred_element_type=jnp.float32)

    @pl.when(t == num_k)
    def _cast_once():
        # Cast h to bf16 exactly once at the phase boundary (not every j-step).
        hb_ref[...] = h_ref[...].astype(hb_ref.dtype)

    @pl.when(t >= num_k)
    def _emit():
        # Phase 2: out_tile = h @ W2t_tile  (h stays resident in VMEM).
        o_ref[...] = jnp.dot(hb_ref[...], w2t_ref[...],
                             preferred_element_type=jnp.float32
                             ).astype(o_ref.dtype)


# ---------------------------------------------------------------------------
# Parameter prep (one-time, hoisted out of the per-call path)
# ---------------------------------------------------------------------------

def prepare_params(w1, b1, w2, compute_dtype=jnp.bfloat16):
    """w1: [E, V], b1: [E], w2: [V, E]  (PyTorch nn.Linear layouts)."""
    E, V = w1.shape
    assert w2.shape == (V, E) and b1.shape == (E,)
    v_pad = _round_up(V, 128)           # minimal vocab padding (lane multiple)
    e_pad = _round_up(E, 128)           # lane-dense hidden dim

    w1t = jnp.zeros((v_pad, e_pad), compute_dtype).at[:V, :E].set(
        w1.T.astype(compute_dtype))     # [V_pad, E_pad]
    b1p = jnp.zeros((1, e_pad), jnp.float32).at[0, :E].set(
        b1.astype(jnp.float32))         # [1, E_pad]  (f32 epilogue)
    w2t = jnp.zeros((e_pad, v_pad), compute_dtype).at[:E, :V].set(
        w2.T.astype(compute_dtype))     # [E_pad, V_pad]

    return dict(w1t=w1t, b1=b1p, w2t=w2t, V=V, E=E,
                v_pad=v_pad, e_pad=e_pad, compute_dtype=compute_dtype)


def get_word_embedding(w2, word_i):
    # Plain parameter indexing (PyTorch .weight[word_i]); no kernel needed.
    return w2[word_i]


# ---------------------------------------------------------------------------
# Forward
# ---------------------------------------------------------------------------

def word2vec_forward(x, params, *, max_batch_tile=256, out_dtype=jnp.float32,
                     tk_cap=2048, tj_cap=512, force_tiled=False):
    """x: [B, V] -> logits [B, V]."""
    B, V = x.shape
    assert V == params["V"]
    v_pad, e_pad = params["v_pad"], params["e_pad"]
    cdt = params["compute_dtype"]
    w_isz = jnp.dtype(cdt).itemsize
    out_isz = jnp.dtype(out_dtype).itemsize

    # ---- adaptive batch tile (16 = bf16 sublane pack) ----------------------
    tb = min(max(max_batch_tile, 16), _round_up(max(B, 1), 16))
    if _round_up(B, tb) // tb == 1 and tb > 16:
        # Split a single oversized batch tile so v7x megacore has 2 tiles.
        tb = _round_up((tb + 1) // 2, 16)
    b_pad = _round_up(B, tb)
    num_b = b_pad // tb

    # Pad only what is needed and cast once to the compute dtype.
    xp = x.astype(cdt)
    if b_pad != B or v_pad != V:
        xp = jnp.pad(xp, ((0, b_pad - B), (0, v_pad - V)))

    vmem_cap = _vmem_capacity_bytes()
    weight_bytes = (params["w1t"].size + params["w2t"].size) * w_isz
    flops = 2 * b_pad * v_pad * e_pad * 2            # both matmuls
    out_shape = jax.ShapeDtypeStruct((b_pad, v_pad), out_dtype)

    # ---- weight-resident fast path -----------------------------------------
    # (2x: BlockSpec inputs are double-buffered even with constant index maps.)
    fast_foot = (2 * weight_bytes
                 + 2 * (tb * v_pad * w_isz            # x tile
                        + tb * v_pad * out_isz        # out tile
                        + e_pad * 4))                 # bias
    fast_budget = min(int(0.35 * vmem_cap), 40 * 1024 * 1024)

    if fast_foot <= fast_budget and not force_tiled:
        bytes_accessed = (weight_bytes + xp.size * w_isz
                          + params["b1"].size * 4 + b_pad * v_pad * out_isz)
        out_padded = pl.pallas_call(
            _fused_resident_kernel,
            out_shape=out_shape,
            grid_spec=pltpu.PrefetchScalarGridSpec(
                num_scalar_prefetch=0,
                grid=(num_b,),
                in_specs=[
                    pl.BlockSpec((tb, v_pad), lambda b: (b, 0)),
                    pl.BlockSpec((v_pad, e_pad), lambda b: (0, 0)),
                    pl.BlockSpec((1, e_pad), lambda b: (0, 0)),
                    pl.BlockSpec((e_pad, v_pad), lambda b: (0, 0)),
                ],
                out_specs=pl.BlockSpec((tb, v_pad), lambda b: (b, 0)),
            ),
            compiler_params=pltpu.CompilerParams(
                dimension_semantics=("parallel",),
                vmem_limit_bytes=int(min(max(2 * fast_foot, 16 * 1024 * 1024),
                                         0.75 * vmem_cap)),
            ),
            cost_estimate=pl.CostEstimate(
                flops=flops, transcendentals=0, bytes_accessed=bytes_accessed),
        )(xp, params["w1t"], params["b1"], params["w2t"])
        return out_padded[:B, :V]

    # ---- tiled two-phase path -----------------------------------------------
    tk = _largest_tile(v_pad, tk_cap)    # phase-1 reduction tile (K only)
    tj = _largest_tile(v_pad, tj_cap)    # phase-2 output-vocab tile
    num_k = v_pad // tk
    num_j = v_pad // tj

    kernel = functools.partial(_two_phase_kernel, num_k=num_k)

    tile_bytes = (tb * tk * w_isz             # x tile
                  + tk * e_pad * w_isz        # W1t tile
                  + e_pad * tj * w_isz        # W2t tile
                  + tb * tj * out_isz         # out tile
                  + e_pad * 4)                # bias
    need = (2 * tile_bytes                                # double-buffered
            + tb * e_pad * 4 + tb * e_pad * w_isz)        # h scratches
    vmem_limit = int(min(max(2 * need, 16 * 1024 * 1024), 0.75 * vmem_cap))

    bytes_accessed = (num_b * weight_bytes + xp.size * w_isz
                      + params["b1"].size * 4 + b_pad * v_pad * out_isz)

    out_padded = pl.pallas_call(
        kernel,
        out_shape=out_shape,
        grid_spec=pltpu.PrefetchScalarGridSpec(
            num_scalar_prefetch=0,
            grid=(num_b, num_k + num_j),
            in_specs=[
                # x tile: advances with the reduction, frozen during phase 2.
                pl.BlockSpec((tb, tk),
                             lambda b, t: (b, jnp.minimum(t, num_k - 1))),
                # W1t tile: streamed during phase 1, frozen during phase 2.
                pl.BlockSpec((tk, e_pad),
                             lambda b, t: (jnp.minimum(t, num_k - 1), 0)),
                # Bias: one small resident block.
                pl.BlockSpec((1, e_pad), lambda b, t: (0, 0)),
                # W2t tile: held during phase 1, streamed during phase 2.
                pl.BlockSpec((e_pad, tj),
                             lambda b, t: (0, jnp.maximum(t - num_k, 0))),
            ],
            out_specs=pl.BlockSpec((tb, tj),
                                   lambda b, t: (b, jnp.maximum(t - num_k, 0))),
            scratch_shapes=[pltpu.VMEM((tb, e_pad), jnp.float32),   # h (f32 acc)
                            pltpu.VMEM((tb, e_pad), cdt)],          # h (bf16)
        ),
        compiler_params=pltpu.CompilerParams(
            dimension_semantics=("parallel", "arbitrary"),
            vmem_limit_bytes=vmem_limit,
        ),
        cost_estimate=pl.CostEstimate(
            flops=flops, transcendentals=0, bytes_accessed=bytes_accessed),
    )(xp, params["w1t"], params["b1"], params["w2t"])

    return out_padded[:B, :V]


def word2vec_ref(x, w1, b1, w2):
    h = x @ w1.T + b1
    return h @ w2.T


if __name__ == "__main__":
    key = jax.random.PRNGKey(0)

    def make_case(k, B, V, E):
        kx, k1, kb, k2 = jax.random.split(k, 4)
        x = jax.random.normal(kx, (B, V), dtype=jnp.float32)
        w1 = jax.random.normal(k1, (E, V), dtype=jnp.float32) * 0.02
        b1 = jax.random.normal(kb, (E,), dtype=jnp.float32) * 0.02
        w2 = jax.random.normal(k2, (V, E), dtype=jnp.float32) * 0.02
        return x, w1, b1, w2

    ka, kb_ = jax.random.split(key)

    # 1) Small demo shape -> weight-resident fast path.
    x, w1, b1, w2 = make_case(ka, B=8, V=256, E=64)
    params = prepare_params(w1, b1, w2)
    out = jax.block_until_ready(word2vec_forward(x, params))
    ref = word2vec_ref(x, w1, b1, w2)
    assert out.shape == (8, 256)
    # bf16 operands with f32 accumulation => relaxed tolerance vs f32 reference.
    assert jnp.allclose(out, ref, atol=1e-2, rtol=5e-2), "fast path mismatch"

    # 2) Exercise the tiled two-phase path (multiple batch / k / j tiles).
    x, w1, b1, w2 = make_case(kb_, B=40, V=512, E=96)
    params = prepare_params(w1, b1, w2)
    out = jax.block_until_ready(
        word2vec_forward(x, params, force_tiled=True,
                         max_batch_tile=32, tk_cap=128, tj_cap=128))
    ref = word2vec_ref(x, w1, b1, w2)
    assert out.shape == (40, 512)
    assert jnp.allclose(out, ref, atol=1e-2, rtol=5e-2), "tiled path mismatch"

    print("KERNEL_OK")
</pallas_src>

<mosaic_0001>
module attributes {stable_mosaic.version = 11 : i64} {
  func.func @_fused_resident_kernel(%arg0: i32, %arg1: memref<16x256xbf16, #tpu.memory_space<vmem>>, %arg2: memref<256x128xbf16, #tpu.memory_space<vmem>>, %arg3: memref<1x128xf32, #tpu.memory_space<vmem>>, %arg4: memref<128x256xbf16, #tpu.memory_space<vmem>>, %arg5: memref<16x256xf32, #tpu.memory_space<vmem>>) attributes {dimension_semantics = [#tpu.dimension_semantics<parallel>], iteration_bounds = array<i64: 1>, scalar_prefetch = 0 : i64, scratch_operands = 0 : i64, tpu.core_type = #tpu.core_type<tc>, window_params = [{transform_indices = @transform_0, window_bounds = array<i64: 16, 256>}, {pipeline_mode = #tpu.pipeline_mode<synchronous>, transform_indices = @transform_1, window_bounds = array<i64: 256, 128>}, {pipeline_mode = #tpu.pipeline_mode<synchronous>, transform_indices = @transform_2, window_bounds = array<i64: 1, 128>}, {pipeline_mode = #tpu.pipeline_mode<synchronous>, transform_indices = @transform_3, window_bounds = array<i64: 128, 256>}, {transform_indices = @transform_4, window_bounds = array<i64: 16, 256>}]} {
    %c0 = arith.constant 0 : index
    %c0_0 = arith.constant 0 : index
    %0 = vector.load %arg1[%c0, %c0_0] : memref<16x256xbf16, #tpu.memory_space<vmem>>, vector<16x256xbf16>
    %c0_1 = arith.constant 0 : index
    %c0_2 = arith.constant 0 : index
    %1 = vector.load %arg2[%c0_1, %c0_2] : memref<256x128xbf16, #tpu.memory_space<vmem>>, vector<256x128xbf16>
    %cst = arith.constant dense<0.000000e+00> : vector<16x128xf32>
    %2 = tpu.matmul %0, %1, %cst {dimension_numbers = #tpu.dot_dimension_numbers<[1], [0], [0], [1], [0, 0, 1, 1], [], []>} : vector<16x256xbf16>, vector<256x128xbf16>, vector<16x128xf32> -> vector<16x128xf32>
    %c0_3 = arith.constant 0 : index
    %c0_4 = arith.constant 0 : index
    %3 = vector.load %arg3[%c0_3, %c0_4] : memref<1x128xf32, #tpu.memory_space<vmem>>, vector<1x128xf32>
    %4 = vector.broadcast %3 : vector<1x128xf32> to vector<16x128xf32>
    %5 = arith.addf %2, %4 : vector<16x128xf32>
    %6 = arith.truncf %5 : vector<16x128xf32> to vector<16x128xbf16>
    %c0_5 = arith.constant 0 : index
    %c0_6 = arith.constant 0 : index
    %7 = vector.load %arg4[%c0_5, %c0_6] : memref<128x256xbf16, #tpu.memory_space<vmem>>, vector<128x256xbf16>
    %cst_7 = arith.constant dense<0.000000e+00> : vector<16x256xf32>
    %8 = tpu.matmul %6, %7, %cst_7 {dimension_numbers = #tpu.dot_dimension_numbers<[1], [0], [0], [1], [0, 0, 1, 1], [], []>} : vector<16x128xbf16>, vector<128x256xbf16>, vector<16x256xf32> -> vector<16x256xf32>
    %c0_8 = arith.constant 0 : index
    %c0_9 = arith.constant 0 : index
    %9 = vector.load %arg5[%c0_8, %c0_9] : memref<16x256xf32, #tpu.memory_space<vmem>>, vector<16x256xf32>
    tpu.vector_store %arg5[%c0_8, %c0_9], %8 {strides = array<i32>} : memref<16x256xf32, #tpu.memory_space<vmem>>, vector<16x256xf32>,
    return
  }
  func.func @transform_0(%arg0: i32) -> (i32, i32) {
    %c0_i32 = arith.constant 0 : i32
    %c0_i32_0 = arith.constant 0 : i32
    return %arg0, %c0_i32 : i32, i32
  }
  func.func @transform_1(%arg0: i32) -> (i32, i32) {
    %c0_i32 = arith.constant 0 : i32
    %c0_i32_0 = arith.constant 0 : i32
    %c0_i32_1 = arith.constant 0 : i32
    return %c0_i32, %c0_i32_0 : i32, i32
  }
  func.func @transform_2(%arg0: i32) -> (i32, i32) {
    %c0_i32 = arith.constant 0 : i32
    %c0_i32_0 = arith.constant 0 : i32
    %c0_i32_1 = arith.constant 0 : i32
    return %c0_i32, %c0_i32_0 : i32, i32
  }
  func.func @transform_3(%arg0: i32) -> (i32, i32) {
    %c0_i32 = arith.constant 0 : i32
    %c0_i32_0 = arith.constant 0 : i32
    %c0_i32_1 = arith.constant 0 : i32
    return %c0_i32, %c0_i32_0 : i32, i32
  }
  func.func @transform_4(%arg0: i32) -> (i32, i32) {
    %c0_i32 = arith.constant 0 : i32
    %c0_i32_0 = arith.constant 0 : i32
    return %arg0, %c0_i32 : i32, i32
  }
}

</mosaic_0001>

<llo_original>
// kernel: tpu_custom_call.1
$region0: #{tpu_custom_call.1}
  #allocation0 [shape = 'u32[]', space=smem, size = 0x4, offset = 0x4, fixed_abs, tag = 'smem constant byte address 0x4 - core index']
  #allocation1 [shape = 'u32[144,128]{1,0:T(1,128)}', space=vmem, size = 0x12000, scoped, tag = 'internal scratch']
  %s0 = inlined_call_operand.hbm [shape: bf16[16,256], index: 0, kind: input, shape index: {}]
  %s1 = inlined_call_operand.hbm [shape: bf16[256,128], index: 1, kind: input, shape index: {}]
  %s2 = inlined_call_operand.vmem [shape: f32[1,128], index: 2, kind: input, shape index: {}]
  %s3 = inlined_call_operand.hbm [shape: bf16[128,256], index: 3, kind: input, shape index: {}]
  %s4 = inlined_call_operand.hbm [shape: f32[16,256], index: 4, kind: output, shape index: {}]
  %s5 = sld [smem:[#allocation0]]
  $region38: #{tpu_custom_call.1} parent=0
    _
  %s7 = ssub.s32 1, %s5
  %s8 = scalar_select 0, %s7, %s5
  $region1: #{tpu_custom_call.1} parent=0
    #allocation2 [shape = 'u8[8192]{0}', space=vmem, size = 0x2000, scoped, tag = 'input window, operand 0, single buffered']
    #allocation3 [shape = 's32[1]{0}', space=sflag, size = 0x4, scoped, tag = 'scoped memory for tpu_custom_call.1']
    #allocation4 [shape = 's32[1]{0}', space=sflag, size = 0x4, scoped, tag = 'scoped memory for tpu_custom_call.1']
    #allocation5 [shape = 'u8[65536]{0}', space=vmem, size = 0x10000, scoped, tag = 'input window, operand 1, single buffered']
    #allocation6 [shape = 's32[1]{0}', space=sflag, size = 0x4, scoped, tag = 'scoped memory for tpu_custom_call.1']
    #allocation7 [shape = 'u8[65536]{0}', space=vmem, size = 0x10000, scoped, tag = 'input window, operand 3, single buffered']
    #allocation8 [shape = 'u8[16384]{0}', space=vmem, size = 0x4000, scoped, tag = 'output window, operand 0, single buffered']
    %9 = vsyncpa [#allocation3], 0
    %10 = vsyncpa [#allocation6], 0
    %11 = vsyncpa [#allocation4], 0
    // Predicated region
    $region2: #{tpu_custom_call.1} parent=1 // pred_check
      _
    $region3: #{tpu_custom_call.1} parent=1 // pred_check_branch
      %13 = sbr.rel (0) target = $region5
    $region4: #{tpu_custom_call.1} parent=1 // pred_region
      %s15 = ssub.s32 256, 256
      %16 = vsyncadd [#allocation3], %s15
      %s17 = sshll.u32 [#allocation2], 4
      %s18 = int_to_ptr.vmem [resolvable:$true] %s17
      %23 = dma.hbm_to_vmem [thread:$0]  %s0, 256, %s18, [#allocation3], 128, 128, 8
    $region5: #{tpu_custom_call.1} parent=1 // pred_fallthru
      _
    // Predicated region
    $region6: #{tpu_custom_call.1} parent=1 // pred_check
      _
    $region7: #{tpu_custom_call.1} parent=1 // pred_check_branch
      %25 = sbr.rel (0) target = $region9
    $region8: #{tpu_custom_call.1} parent=1 // pred_region
      %s27 = ssub.s32 2048, 2048
      %28 = vsyncadd [#allocation6], %s27
      %s29 = sshll.u32 [#allocation5], 4
      %s30 = int_to_ptr.vmem [resolvable:$true] %s29
      %35 = dma.hbm_to_vmem [thread:$0]  %s1, 2048, %s30, [#allocation6], 64, 64, 4
    $region9: #{tpu_custom_call.1} parent=1 // pred_fallthru
      _
    // Predicated region
    $region10: #{tpu_custom_call.1} parent=1 // pred_check
      _
    $region11: #{tpu_custom_call.1} parent=1 // pred_check_branch
      %37 = sbr.rel (0) target = $region13
    $region12: #{tpu_custom_call.1} parent=1 // pred_region
      _
    $region13: #{tpu_custom_call.1} parent=1 // pred_fallthru
      _
    // Predicated region
    $region14: #{tpu_custom_call.1} parent=1 // pred_check
      _
    $region15: #{tpu_custom_call.1} parent=1 // pred_check_branch
      %39 = sbr.rel (0) target = $region17
    $region16: #{tpu_custom_call.1} parent=1 // pred_region
      %s41 = ssub.s32 2048, 2048
      %42 = vsyncadd [#allocation6], %s41
      %s43 = sshll.u32 [#allocation7], 4
      %s44 = int_to_ptr.vmem [resolvable:$true] %s43
      %49 = dma.hbm_to_vmem [thread:$0]  %s3, 2048, %s44, [#allocation6], 128, 128, 8
    $region17: #{tpu_custom_call.1} parent=1 // pred_fallthru
      _
    // Predicated region
    $region18: #{tpu_custom_call.1} parent=1 // pred_check
      _
    $region19: #{tpu_custom_call.1} parent=1 // pred_check_branch
      %51 = sbr.rel (0) target = $region21
    $region20: #{tpu_custom_call.1} parent=1 // pred_region
      %52 = dma.done [#allocation3], 256
    $region21: #{tpu_custom_call.1} parent=1 // pred_fallthru
      _
    // Predicated region
    $region22: #{tpu_custom_call.1} parent=1 // pred_check
      _
    $region23: #{tpu_custom_call.1} parent=1 // pred_check_branch
      %54 = sbr.rel (0) target = $region25
    $region24: #{tpu_custom_call.1} parent=1 // pred_region
      %55 = dma.done [#allocation6], 2048
    $region25: #{tpu_custom_call.1} parent=1 // pred_fallthru
      _
    // Predicated region
    $region26: #{tpu_custom_call.1} parent=1 // pred_check
      _
    $region27: #{tpu_custom_call.1} parent=1 // pred_check_branch
      %57 = sbr.rel (0) target = $region29
    $region28: #{tpu_custom_call.1} parent=1 // pred_region
      %58 = dma.done [#allocation6], 2048
    $region29: #{tpu_custom_call.1} parent=1 // pred_fallthru
      _
    %v60 = vld [vmem:[#allocation2] sm:$0xff]
    %v61 = vld [vmem:[#allocation2 + $0x8] sm:$0xff]
    %v62 = vld [vmem:[#allocation5] sm:$0xf]
    %v63 = vld [vmem:[#allocation5 + $0x4] sm:$0xf]
    %v64 = vld [vmem:[#allocation5 + $0x8] sm:$0xf]
    %v65 = vld [vmem:[#allocation5 + $0xc] sm:$0xf]
    %v66 = vld [vmem:[#allocation5 + $0x10] sm:$0xf]
    %v67 = vld [vmem:[#allocation5 + $0x14] sm:$0xf]
    %v68 = vld [vmem:[#allocation5 + $0x18] sm:$0xf]
    %v69 = vld [vmem:[#allocation5 + $0x1c] sm:$0xf]
    %v70 = vld [vmem:[#allocation5 + $0x20] sm:$0xf]
    %v71 = vld [vmem:[#allocation5 + $0x24] sm:$0xf]
    %v72 = vld [vmem:[#allocation5 + $0x28] sm:$0xf]
    %v73 = vld [vmem:[#allocation5 + $0x2c] sm:$0xf]
    %v74 = vld [vmem:[#allocation5 + $0x30] sm:$0xf]
    %v75 = vld [vmem:[#allocation5 + $0x34] sm:$0xf]
    %v76 = vld [vmem:[#allocation5 + $0x38] sm:$0xf]
    %v77 = vld [vmem:[#allocation5 + $0x3c] sm:$0xf]
    %v78 = vld [vmem:[#allocation5 + $0x40] sm:$0xf]
    %v79 = vld [vmem:[#allocation5 + $0x44] sm:$0xf]
    %v80 = vld [vmem:[#allocation5 + $0x48] sm:$0xf]
    %v81 = vld [vmem:[#allocation5 + $0x4c] sm:$0xf]
    %v82 = vld [vmem:[#allocation5 + $0x50] sm:$0xf]
    %v83 = vld [vmem:[#allocation5 + $0x54] sm:$0xf]
    %v84 = vld [vmem:[#allocation5 + $0x58] sm:$0xf]
    %v85 = vld [vmem:[#allocation5 + $0x5c] sm:$0xf]
    %v86 = vld [vmem:[#allocation5 + $0x60] sm:$0xf]
    %v87 = vld [vmem:[#allocation5 + $0x64] sm:$0xf]
    %v88 = vld [vmem:[#allocation5 + $0x68] sm:$0xf]
    %v89 = vld [vmem:[#allocation5 + $0x6c] sm:$0xf]
    %v90 = vld [vmem:[#allocation5 + $0x70] sm:$0xf]
    %v91 = vld [vmem:[#allocation5 + $0x74] sm:$0xf]
    %v92 = vld [vmem:[#allocation5 + $0x78] sm:$0xf]
    %v93 = vld [vmem:[#allocation5 + $0x7c] sm:$0xf]
    %v94 = vld [vmem:[%s2] sm:$0x1]
    %v96 = vlaneseq
    %v97 = vshrl.u32 %v96, 7
    %v98 = vsub.s32 0, %v97
    %v99 = vrot.slane %v94, %v98
    %v103 = vunpack.c.l.b16 %v60
    %v104 = vunpack.c.h.b16 %v60
    %v105 = vunpack.c.l.b16 %v61
    %v106 = vunpack.c.h.b16 %v61
    %v107 = vpack.c.b16 %v105, %v103
    %v108 = vpack.c.b16 %v106, %v104
    %v143 = vunpack.c.l.b16 %v62
    %v144 = vunpack.c.l.b16 %v63
    %v145 = vunpack.c.l.b16 %v64
    %v146 = vunpack.c.l.b16 %v65
    %v147 = vunpack.c.l.b16 %v66
    %v148 = vunpack.c.l.b16 %v67
    %v149 = vunpack.c.l.b16 %v68
    %v150 = vunpack.c.l.b16 %v69
    %v151 = vunpack.c.l.b16 %v70
    %v152 = vunpack.c.l.b16 %v71
    %v153 = vunpack.c.l.b16 %v72
    %v154 = vunpack.c.l.b16 %v73
    %v155 = vunpack.c.l.b16 %v74
    %v156 = vunpack.c.l.b16 %v75
    %v157 = vunpack.c.l.b16 %v76
    %v158 = vunpack.c.l.b16 %v77
    %v159 = vunpack.c.l.b16 %v78
    %v160 = vunpack.c.l.b16 %v79
    %v161 = vunpack.c.l.b16 %v80
    %v162 = vunpack.c.l.b16 %v81
    %v163 = vunpack.c.l.b16 %v82
    %v164 = vunpack.c.l.b16 %v83
    %v165 = vunpack.c.l.b16 %v84
    %v166 = vunpack.c.l.b16 %v85
    %v167 = vunpack.c.l.b16 %v86
    %v168 = vunpack.c.l.b16 %v87
    %v169 = vunpack.c.l.b16 %v88
    %v170 = vunpack.c.l.b16 %v89
    %v171 = vunpack.c.l.b16 %v90
    %v172 = vunpack.c.l.b16 %v91
    %v173 = vunpack.c.l.b16 %v92
    %v174 = vunpack.c.l.b16 %v93
    %v175 = vpack.c.b16 %v144, %v143
    %v176 = vpack.c.b16 %v146, %v145
    %v177 = vpack.c.b16 %v148, %v147
    %v178 = vpack.c.b16 %v150, %v149
    %v179 = vpack.c.b16 %v152, %v151
    %v180 = vpack.c.b16 %v154, %v153
    %v181 = vpack.c.b16 %v156, %v155
    %v182 = vpack.c.b16 %v158, %v157
    %v183 = vpack.c.b16 %v160, %v159
    %v184 = vpack.c.b16 %v162, %v161
    %v185 = vpack.c.b16 %v164, %v163
    %v186 = vpack.c.b16 %v166, %v165
    %v187 = vpack.c.b16 %v168, %v167
    %v188 = vpack.c.b16 %v170, %v169
    %v189 = vpack.c.b16 %v172, %v171
    %v190 = vpack.c.b16 %v174, %v173
    %207 = vmatprep.subr.bf16.mxu0 0
    %208 = vmatpush1.bf16.msra.mxu0 %v175
    %209 = vmatprep.subr.bf16.mxu0 0
    %210 = vmatpush1.bf16.msra.mxu0 %v176
    %211 = vmatprep.subr.bf16.mxu0 0
    %212 = vmatpush1.bf16.msra.mxu0 %v177
    %213 = vmatprep.subr.bf16.mxu0 0
    %214 = vmatpush1.bf16.msra.mxu0 %v178
    %215 = vmatprep.subr.bf16.mxu0 0
    %216 = vmatpush1.bf16.msra.mxu0 %v179
    %217 = vmatprep.subr.bf16.mxu0 0
    %218 = vmatpush1.bf16.msra.mxu0 %v180
    %219 = vmatprep.subr.bf16.mxu0 0
    %220 = vmatpush1.bf16.msra.mxu0 %v181
    %221 = vmatprep.subr.bf16.mxu0 0
    %222 = vmatpush1.bf16.msra.mxu0 %v182
    %223 = vmatprep.subr.bf16.mxu0 0
    %224 = vmatpush1.bf16.msra.mxu0 %v183
    %225 = vmatprep.subr.bf16.mxu0 0
    %226 = vmatpush1.bf16.msra.mxu0 %v184
    %227 = vmatprep.subr.bf16.mxu0 0
    %228 = vmatpush1.bf16.msra.mxu0 %v185
    %229 = vmatprep.subr.bf16.mxu0 0
    %230 = vmatpush1.bf16.msra.mxu0 %v186
    %231 = vmatprep.subr.bf16.mxu0 0
    %232 = vmatpush1.bf16.msra.mxu0 %v187
    %233 = vmatprep.subr.bf16.mxu0 0
    %234 = vmatpush1.bf16.msra.mxu0 %v188
    %235 = vmatprep.subr.bf16.mxu0 0
    %236 = vmatpush1.bf16.msra.mxu0 %v189
    %237 = vmatprep.subr.bf16.mxu0 0
    %238 = vmatpush1.bf16.msra.mxu0 %v190
    %239 = vmatprep.mubr.bf16.mxu0 %v108
    %240 = vmatmul.mubr.bf16.gmra.mrb[0].mxu0 %v107
    %v241 = vpop.f32.mrb[0].mxu0
    %v242 = vadd.f32 %v99, %v241
    %v243 = vpop.f32.mrb[0].mxu0
    %v244 = vpop.f32.mrb[0].mxu0
    %v245 = vadd.f32 %v99, %v244
    %v246 = vpop.f32.mrb[0].mxu0
    %247 = vdwg.mxu0
    %v248 = vpack.c.bf16 %v245, %v242
    %v249 = vld [vmem:[#allocation7] sm:$0xff]
    %v250 = vld [vmem:[#allocation7 + $0x8] sm:$0xff]
    %v251 = vld [vmem:[#allocation7 + $0x10] sm:$0xff]
    %v252 = vld [vmem:[#allocation7 + $0x18] sm:$0xff]
    %v253 = vld [vmem:[#allocation7 + $0x20] sm:$0xff]
    %v254 = vld [vmem:[#allocation7 + $0x28] sm:$0xff]
    %v255 = vld [vmem:[#allocation7 + $0x30] sm:$0xff]
    %v256 = vld [vmem:[#allocation7 + $0x38] sm:$0xff]
    %v257 = vld [vmem:[#allocation7 + $0x40] sm:$0xff]
    %v258 = vld [vmem:[#allocation7 + $0x48] sm:$0xff]
    %v259 = vld [vmem:[#allocation7 + $0x50] sm:$0xff]
    %v260 = vld [vmem:[#allocation7 + $0x58] sm:$0xff]
    %v261 = vld [vmem:[#allocation7 + $0x60] sm:$0xff]
    %v262 = vld [vmem:[#allocation7 + $0x68] sm:$0xff]
    %v263 = vld [vmem:[#allocation7 + $0x70] sm:$0xff]
    %v264 = vld [vmem:[#allocation7 + $0x78] sm:$0xff]
    %v281 = vunpack.c.l.b16 %v249
    %v282 = vunpack.c.h.b16 %v249
    %v283 = vunpack.c.l.b16 %v250
    %v284 = vunpack.c.h.b16 %v250
    %v285 = vunpack.c.l.b16 %v251
    %v286 = vunpack.c.h.b16 %v251
    %v287 = vunpack.c.l.b16 %v252
    %v288 = vunpack.c.h.b16 %v252
    %v289 = vunpack.c.l.b16 %v253
    %v290 = vunpack.c.h.b16 %v253
    %v291 = vunpack.c.l.b16 %v254
    %v292 = vunpack.c.h.b16 %v254
    %v293 = vunpack.c.l.b16 %v255
    %v294 = vunpack.c.h.b16 %v255
    %v295 = vunpack.c.l.b16 %v256
    %v296 = vunpack.c.h.b16 %v256
    %v297 = vunpack.c.l.b16 %v257
    %v298 = vunpack.c.h.b16 %v257
    %v299 = vunpack.c.l.b16 %v258
    %v300 = vunpack.c.h.b16 %v258
    %v301 = vunpack.c.l.b16 %v259
    %v302 = vunpack.c.h.b16 %v259
    %v303 = vunpack.c.l.b16 %v260
    %v304 = vunpack.c.h.b16 %v260
    %v305 = vunpack.c.l.b16 %v261
    %v306 = vunpack.c.h.b16 %v261
    %v307 = vunpack.c.l.b16 %v262
    %v308 = vunpack.c.h.b16 %v262
    %v309 = vunpack.c.l.b16 %v263
    %v310 = vunpack.c.h.b16 %v263
    %v311 = vunpack.c.l.b16 %v264
    %v312 = vunpack.c.h.b16 %v264
    %v313 = vpack.c.b16 %v283, %v281
    %v314 = vpack.c.b16 %v284, %v282
    %v315 = vpack.c.b16 %v287, %v285
    %v316 = vpack.c.b16 %v288, %v286
    %v317 = vpack.c.b16 %v291, %v289
    %v318 = vpack.c.b16 %v292, %v290
    %v319 = vpack.c.b16 %v295, %v293
    %v320 = vpack.c.b16 %v296, %v294
    %v321 = vpack.c.b16 %v299, %v297
    %v322 = vpack.c.b16 %v300, %v298
    %v323 = vpack.c.b16 %v303, %v301
    %v324 = vpack.c.b16 %v304, %v302
    %v325 = vpack.c.b16 %v307, %v305
    %v326 = vpack.c.b16 %v308, %v306
    %v327 = vpack.c.b16 %v311, %v309
    %v328 = vpack.c.b16 %v312, %v310
    %345 = vmatprep.subr.bf16.mxu0 %v314
    %346 = vmatpush1.bf16.msra.mxu0 %v313
    %347 = vmatprep.subr.bf16.mxu0 %v316
    %348 = vmatpush1.bf16.msra.mxu0 %v315
    %349 = vmatprep.subr.bf16.mxu0 %v318
    %350 = vmatpush1.bf16.msra.mxu0 %v317
    %351 = vmatprep.subr.bf16.mxu0 %v320
    %352 = vmatpush1.bf16.msra.mxu0 %v319
    %353 = vmatprep.subr.bf16.mxu0 %v322
    %354 = vmatpush1.bf16.msra.mxu0 %v321
    %355 = vmatprep.subr.bf16.mxu0 %v324
    %356 = vmatpush1.bf16.msra.mxu0 %v323
    %357 = vmatprep.subr.bf16.mxu0 %v326
    %358 = vmatpush1.bf16.msra.mxu0 %v325
    %359 = vmatprep.subr.bf16.mxu0 %v328
    %360 = vmatpush1.bf16.msra.mxu0 %v327
    %361 = vmatprep.subr.bf16.mxu0 0
    %362 = vmatpush1.bf16.msra.mxu0 0
    %363 = vmatprep.subr.bf16.mxu0 0
    %364 = vmatpush1.bf16.msra.mxu0 0
    %365 = vmatprep.subr.bf16.mxu0 0
    %366 = vmatpush1.bf16.msra.mxu0 0
    %367 = vmatprep.subr.bf16.mxu0 0
    %368 = vmatpush1.bf16.msra.mxu0 0
    %369 = vmatprep.subr.bf16.mxu0 0
    %370 = vmatpush1.bf16.msra.mxu0 0
    %371 = vmatprep.subr.bf16.mxu0 0
    %372 = vmatpush1.bf16.msra.mxu0 0
    %373 = vmatprep.subr.bf16.mxu0 0
    %374 = vmatpush1.bf16.msra.mxu0 0
    %375 = vmatprep.subr.bf16.mxu0 0
    %376 = vmatpush1.bf16.msra.mxu0 0
    %377 = vmatprep.mubr.bf16.mxu0 0
    %378 = vmatmul.mubr.bf16.gmra.mrb[0].mxu0 %v248
    %v379 = vpop.f32.mrb[0].mxu0
    %v380 = vadd.f32 0.0, %v379
    %v381 = vpop.f32.mrb[0].mxu0
    %v382 = vadd.f32 0.0, %v381
    %v383 = vpop.f32.mrb[0].mxu0
    %v384 = vadd.f32 0.0, %v383
    %v385 = vpop.f32.mrb[0].mxu0
    %v386 = vadd.f32 0.0, %v385
    %387 = vdwg.mxu0
    %388 = vst [vmem:[#allocation8] sm:$0xff] %v380
    %389 = vst [vmem:[#allocation8 + $0x8] sm:$0xff] %v382
    %390 = vst [vmem:[#allocation8 + $0x10] sm:$0xff] %v384
    %391 = vst [vmem:[#allocation8 + $0x18] sm:$0xff] %v386
    // Predicated region
    $region30: #{tpu_custom_call.1} parent=1 // pred_check
      _
    $region31: #{tpu_custom_call.1} parent=1 // pred_check_branch
      %393 = sbr.rel (0) target = $region33
    $region32: #{tpu_custom_call.1} parent=1 // pred_region
      %s395 = ssub.s32 512, 512
      %396 = vsyncadd [#allocation4], %s395
      %s397 = sshll.u32 [#allocation8], 4
      %s398 = int_to_ptr.vmem [resolvable:$true] %s397
      %403 = dma.vmem_to_hbm [thread:$0]  %s398, 512, %s4, [#allocation4], 256, 256, 16
    $region33: #{tpu_custom_call.1} parent=1 // pred_fallthru
      _
    // Predicated region
    $region34: #{tpu_custom_call.1} parent=1 // pred_check
      _
    $region35: #{tpu_custom_call.1} parent=1 // pred_check_branch
      %405 = sbr.rel (0) target = $region37
    $region36: #{tpu_custom_call.1} parent=1 // pred_region
      %406 = dma.done [#allocation4], 512
    $region37: #{tpu_custom_call.1} parent=1 // pred_fallthru
      _
    %407 = vsyncpa [#allocation3], 1
    %408 = vsyncpa [#allocation6], 1
    %409 = vsyncpa [#allocation4], 1

</llo_original>
